<compile_context>
chip_gen: v7x
topology: tpu7x:2x2x1
jax: 0.10.0
libtpu: 0.0.40
codegen_flags: <defaults>
</compile_context>

<pallas_src>
import functools
import math

import jax
import jax.numpy as jnp
from jax.experimental import pallas as pl
from jax.experimental.pallas import tpu as pltpu


def _round_up(n, m):
    return ((n + m - 1) // m) * m


def _pos_enc_sine_kernel(x_ref, d_ref, o_ref, *, half, phase_scale):
    # x_ref / o_ref: (1, C, R_BLK, 128)    d_ref: (1, R_BLK, 128)
    theta = d_ref[0].astype(jnp.float32) * jnp.float32(phase_scale)  # (R_BLK, 128)

    # Two transcendental evaluations per spatial element; every higher harmonic
    # is generated with the angle-addition recurrence (pure VPU FMAs):
    #   sin((k+1)t) = sin(kt)*cos(t) + cos(kt)*sin(t)
    #   cos((k+1)t) = cos(kt)*cos(t) - sin(kt)*sin(t)
    s1 = jnp.sin(theta)
    c1 = jnp.cos(theta)

    sin_k = jnp.zeros_like(theta)  # sin(0 * theta)
    cos_k = jnp.ones_like(theta)   # cos(0 * theta)

    for k in range(half):
        # Channel k gets sin(k*theta); channel k + half gets cos(k*theta).
        # Add in f32, cast once on store.
        o_ref[0, k] = (x_ref[0, k].astype(jnp.float32) + sin_k).astype(o_ref.dtype)
        o_ref[0, k + half] = (
            x_ref[0, k + half].astype(jnp.float32) + cos_k
        ).astype(o_ref.dtype)
        if k + 1 < half:
            sin_next = sin_k * c1 + cos_k * s1
            cos_next = cos_k * c1 - sin_k * s1
            sin_k, cos_k = sin_next, cos_next


def pos_enc_sine(x, depth, temperature=1000):
    """x: (B, C, D, H, W); depth: (B, D, H, W). Returns x + sinusoidal pos enc."""
    B, C, D, H, W = x.shape
    assert C % 2 == 0, "C must be even (C//2 sin channels + C//2 cos channels)"
    assert depth.shape == (B, D, H, W)
    half = C // 2
    S = D * H * W

    # ---- Tile geometry: lane- AND sublane-dense (.., r_blk, 128) blocks ----
    itemsize = jnp.dtype(x.dtype).itemsize
    r_min = pl.cdiv(S, 128)                     # rows of 128 lanes needed

    # ~4 MiB x tile (double-buffered in + out + depth stays well under the
    # explicit 48 MiB VMEM limit on every generation).
    target_tile_bytes = 4 * 1024 * 1024
    bytes_per_row = C * 128 * itemsize
    r_blk = max(8, (target_tile_bytes // bytes_per_row) // 8 * 8)

    # Keep enough grid steps to feed both v7x TensorCores / hide step overhead.
    min_steps = 8
    blocks_wanted = max(1, pl.cdiv(min_steps, B))
    r_blk_par = max(8, _round_up(pl.cdiv(r_min, blocks_wanted), 8))
    r_blk = min(r_blk, r_blk_par, _round_up(r_min, 8))

    R = _round_up(r_min, r_blk)                 # rows after padding
    S_pad = R * 128

    # ---- Reshape / zero-pad to (B, C, R, 128) and (B, R, 128) --------------
    x2 = x.reshape(B, C, S)
    d2 = depth.reshape(B, S)
    if S_pad != S:
        x2 = jnp.pad(x2, ((0, 0), (0, 0), (0, S_pad - S)))
        d2 = jnp.pad(d2, ((0, 0), (0, S_pad - S)))
    x4 = x2.reshape(B, C, R, 128)
    d3 = d2.reshape(B, R, 128)

    grid = (B, R // r_blk)

    kernel = functools.partial(
        _pos_enc_sine_kernel,
        half=half,
        phase_scale=math.pi / float(temperature),
    )

    out = pl.pallas_call(
        kernel,
        out_shape=jax.ShapeDtypeStruct((B, C, R, 128), x.dtype),
        grid=grid,
        in_specs=[
            pl.BlockSpec((1, C, r_blk, 128), lambda b, s: (b, 0, s, 0)),
            pl.BlockSpec((1, r_blk, 128), lambda b, s: (b, s, 0)),
        ],
        out_specs=pl.BlockSpec((1, C, r_blk, 128), lambda b, s: (b, 0, s, 0)),
        input_output_aliases={0: 0},
        compiler_params=pltpu.CompilerParams(
            dimension_semantics=("parallel", "parallel"),
            vmem_limit_bytes=48 * 1024 * 1024,
        ),
    )(x4, d3)

    out = out.reshape(B, C, S_pad)[:, :, :S].reshape(B, C, D, H, W)
    return out


def _pos_enc_sine_ref(x, depth, temperature=1000):
    """Pure-JAX reference mirroring the PyTorch code path."""
    B, C, D, H, W = x.shape
    half = C // 2
    d = jnp.transpose(depth, (0, 2, 3, 1)).reshape(B * H * W, D) / temperature
    parts = [jnp.sin(i * math.pi * d) for i in range(half)] + [
        jnp.cos(i * math.pi * d) for i in range(half)
    ]
    pos = jnp.stack(parts, axis=-1)                    # (B*H*W, D, C)
    pos = pos.reshape(B, H, W, D, C).transpose(0, 4, 3, 1, 2)
    return x + pos


if __name__ == "__main__":
    key = jax.random.PRNGKey(0)
    k1, k2, k3, k4 = jax.random.split(key, 4)

    # Case 1: lane-aligned spatial extent (no padding needed).
    B, C, D, H, W = 2, 4, 8, 16, 16
    x = jax.random.normal(k1, (B, C, D, H, W), dtype=jnp.float32)
    depth = jax.random.uniform(k2, (B, D, H, W), dtype=jnp.float32) * 100.0
    out = jax.block_until_ready(pos_enc_sine(x, depth, temperature=1000))
    ref = _pos_enc_sine_ref(x, depth, temperature=1000)
    assert out.shape == (B, C, D, H, W)
    assert jnp.allclose(out, ref, atol=1e-5, rtol=1e-5), "mismatch vs reference (case 1)"

    # Case 2: ragged spatial extent (exercises padding) + higher harmonics (C=6).
    B, C, D, H, W = 1, 6, 5, 7, 9
    x = jax.random.normal(k3, (B, C, D, H, W), dtype=jnp.float32)
    depth = jax.random.uniform(k4, (B, D, H, W), dtype=jnp.float32) * 50.0
    out = jax.block_until_ready(pos_enc_sine(x, depth, temperature=500))
    ref = _pos_enc_sine_ref(x, depth, temperature=500)
    assert out.shape == (B, C, D, H, W)
    assert jnp.allclose(out, ref, atol=1e-5, rtol=1e-5), "mismatch vs reference (case 2)"

    print("KERNEL_OK")
</pallas_src>

<mosaic_0001>
module attributes {stable_mosaic.version = 11 : i64} {
  func.func @_pos_enc_sine_kernel(%arg0: i32, %arg1: i32, %arg2: memref<1x4x8x128xf32, #tpu.memory_space<vmem>>, %arg3: memref<1x8x128xf32, #tpu.memory_space<vmem>>, %arg4: memref<1x4x8x128xf32, #tpu.memory_space<vmem>>) attributes {dimension_semantics = [#tpu.dimension_semantics<parallel>, #tpu.dimension_semantics<parallel>], iteration_bounds = array<i64: 2, 2>, scalar_prefetch = 0 : i64, scratch_operands = 0 : i64, tpu.core_type = #tpu.core_type<tc>, window_params = [{transform_indices = @transform_0, window_bounds = array<i64: 1, 4, 8, 128>}, {transform_indices = @transform_1, window_bounds = array<i64: 1, 8, 128>}, {transform_indices = @transform_2, window_bounds = array<i64: 1, 4, 8, 128>}]} {
    %c0 = arith.constant 0 : index
    %c0_0 = arith.constant 0 : index
    %c0_1 = arith.constant 0 : index
    %0 = vector.load %arg3[%c0, %c0_0, %c0_1] : memref<1x8x128xf32, #tpu.memory_space<vmem>>, vector<1x8x128xf32>
    %1 = vector.shape_cast %0 : vector<1x8x128xf32> to vector<8x128xf32>
    %cst = arith.constant 0.00314159272 : f32
    %2 = vector.broadcast %cst : f32 to vector<8x128xf32>
    %3 = arith.mulf %1, %2 : vector<8x128xf32>
    %4 = math.sin %3 : vector<8x128xf32>
    %5 = math.cos %3 : vector<8x128xf32>
    %cst_2 = arith.constant 0.000000e+00 : f32
    %6 = vector.broadcast %cst_2 : f32 to vector<8x128xf32>
    %cst_3 = arith.constant 1.000000e+00 : f32
    %7 = vector.broadcast %cst_3 : f32 to vector<8x128xf32>
    %c0_4 = arith.constant 0 : index
    %c0_5 = arith.constant 0 : index
    %c0_6 = arith.constant 0 : index
    %c0_7 = arith.constant 0 : index
    %8 = vector.load %arg2[%c0_4, %c0_5, %c0_6, %c0_7] : memref<1x4x8x128xf32, #tpu.memory_space<vmem>>, vector<1x1x8x128xf32>
    %9 = vector.shape_cast %8 : vector<1x1x8x128xf32> to vector<8x128xf32>
    %10 = arith.addf %9, %6 : vector<8x128xf32>
    %c0_8 = arith.constant 0 : index
    %c0_9 = arith.constant 0 : index
    %c0_10 = arith.constant 0 : index
    %c0_11 = arith.constant 0 : index
    %11 = vector.load %arg4[%c0_8, %c0_9, %c0_10, %c0_11] : memref<1x4x8x128xf32, #tpu.memory_space<vmem>>, vector<1x1x8x128xf32>
    %12 = vector.shape_cast %11 : vector<1x1x8x128xf32> to vector<8x128xf32>
    %13 = vector.shape_cast %10 : vector<8x128xf32> to vector<1x1x8x128xf32>
    tpu.vector_store %arg4[%c0_8, %c0_9, %c0_10, %c0_11], %13 {strides = array<i32>} : memref<1x4x8x128xf32, #tpu.memory_space<vmem>>, vector<1x1x8x128xf32>,
    %c0_12 = arith.constant 0 : index
    %c2 = arith.constant 2 : index
    %c0_13 = arith.constant 0 : index
    %c0_14 = arith.constant 0 : index
    %14 = vector.load %arg2[%c0_12, %c2, %c0_13, %c0_14] : memref<1x4x8x128xf32, #tpu.memory_space<vmem>>, vector<1x1x8x128xf32>
    %15 = vector.shape_cast %14 : vector<1x1x8x128xf32> to vector<8x128xf32>
    %16 = arith.addf %15, %7 : vector<8x128xf32>
    %c0_15 = arith.constant 0 : index
    %c2_16 = arith.constant 2 : index
    %c0_17 = arith.constant 0 : index
    %c0_18 = arith.constant 0 : index
    %17 = vector.load %arg4[%c0_15, %c2_16, %c0_17, %c0_18] : memref<1x4x8x128xf32, #tpu.memory_space<vmem>>, vector<1x1x8x128xf32>
    %18 = vector.shape_cast %17 : vector<1x1x8x128xf32> to vector<8x128xf32>
    %19 = vector.shape_cast %16 : vector<8x128xf32> to vector<1x1x8x128xf32>
    tpu.vector_store %arg4[%c0_15, %c2_16, %c0_17, %c0_18], %19 {strides = array<i32>} : memref<1x4x8x128xf32, #tpu.memory_space<vmem>>, vector<1x1x8x128xf32>,
    %20 = arith.mulf %6, %5 : vector<8x128xf32>
    %21 = arith.mulf %7, %4 : vector<8x128xf32>
    %22 = arith.addf %20, %21 : vector<8x128xf32>
    %23 = arith.mulf %7, %5 : vector<8x128xf32>
    %24 = arith.mulf %6, %4 : vector<8x128xf32>
    %25 = arith.subf %23, %24 : vector<8x128xf32>
    %c0_19 = arith.constant 0 : index
    %c1 = arith.constant 1 : index
    %c0_20 = arith.constant 0 : index
    %c0_21 = arith.constant 0 : index
    %26 = vector.load %arg2[%c0_19, %c1, %c0_20, %c0_21] : memref<1x4x8x128xf32, #tpu.memory_space<vmem>>, vector<1x1x8x128xf32>
    %27 = vector.shape_cast %26 : vector<1x1x8x128xf32> to vector<8x128xf32>
    %28 = arith.addf %27, %22 : vector<8x128xf32>
    %c0_22 = arith.constant 0 : index
    %c1_23 = arith.constant 1 : index
    %c0_24 = arith.constant 0 : index
    %c0_25 = arith.constant 0 : index
    %29 = vector.load %arg4[%c0_22, %c1_23, %c0_24, %c0_25] : memref<1x4x8x128xf32, #tpu.memory_space<vmem>>, vector<1x1x8x128xf32>
    %30 = vector.shape_cast %29 : vector<1x1x8x128xf32> to vector<8x128xf32>
    %31 = vector.shape_cast %28 : vector<8x128xf32> to vector<1x1x8x128xf32>
    tpu.vector_store %arg4[%c0_22, %c1_23, %c0_24, %c0_25], %31 {strides = array<i32>} : memref<1x4x8x128xf32, #tpu.memory_space<vmem>>, vector<1x1x8x128xf32>,
    %c0_26 = arith.constant 0 : index
    %c3 = arith.constant 3 : index
    %c0_27 = arith.constant 0 : index
    %c0_28 = arith.constant 0 : index
    %32 = vector.load %arg2[%c0_26, %c3, %c0_27, %c0_28] : memref<1x4x8x128xf32, #tpu.memory_space<vmem>>, vector<1x1x8x128xf32>
    %33 = vector.shape_cast %32 : vector<1x1x8x128xf32> to vector<8x128xf32>
    %34 = arith.addf %33, %25 : vector<8x128xf32>
    %c0_29 = arith.constant 0 : index
    %c3_30 = arith.constant 3 : index
    %c0_31 = arith.constant 0 : index
    %c0_32 = arith.constant 0 : index
    %35 = vector.load %arg4[%c0_29, %c3_30, %c0_31, %c0_32] : memref<1x4x8x128xf32, #tpu.memory_space<vmem>>, vector<1x1x8x128xf32>
    %36 = vector.shape_cast %35 : vector<1x1x8x128xf32> to vector<8x128xf32>
    %37 = vector.shape_cast %34 : vector<8x128xf32> to vector<1x1x8x128xf32>
    tpu.vector_store %arg4[%c0_29, %c3_30, %c0_31, %c0_32], %37 {strides = array<i32>} : memref<1x4x8x128xf32, #tpu.memory_space<vmem>>, vector<1x1x8x128xf32>,
    return
  }
  func.func @transform_0(%arg0: i32, %arg1: i32) -> (i32, i32, i32, i32) {
    %c0_i32 = arith.constant 0 : i32
    %c0_i32_0 = arith.constant 0 : i32
    %c0_i32_1 = arith.constant 0 : i32
    return %arg0, %c0_i32, %arg1, %c0_i32_0 : i32, i32, i32, i32
  }
  func.func @transform_1(%arg0: i32, %arg1: i32) -> (i32, i32, i32) {
    %c0_i32 = arith.constant 0 : i32
    %c0_i32_0 = arith.constant 0 : i32
    return %arg0, %arg1, %c0_i32 : i32, i32, i32
  }
  func.func @transform_2(%arg0: i32, %arg1: i32) -> (i32, i32, i32, i32) {
    %c0_i32 = arith.constant 0 : i32
    %c0_i32_0 = arith.constant 0 : i32
    %c0_i32_1 = arith.constant 0 : i32
    return %arg0, %c0_i32, %arg1, %c0_i32_0 : i32, i32, i32, i32
  }
}

</mosaic_0001>

<llo_original>
// kernel: tpu_custom_call.1
$region0: #{tpu_custom_call.1}
  #allocation0 [shape = 'u32[]', space=smem, size = 0x4, offset = 0x4, fixed_abs, tag = 'smem constant byte address 0x4 - core index']
  #allocation1 [shape = 'u32[144,128]{1,0:T(1,128)}', space=vmem, size = 0x12000, scoped, tag = 'internal scratch']
  %s0 = inlined_call_operand.hbm [shape: f32[2,4,16,128], index: 0, kind: input, shape index: {}, may-alias: {0,2}]
  %s1 = inlined_call_operand.vmem [shape: f32[2,16,128], index: 1, kind: input, shape index: {}]
  %s2 = inlined_call_operand.hbm [shape: f32[2,4,16,128], index: 2, kind: output, shape index: {}, may-alias: {0,2}]
  %s3 = sld [smem:[#allocation0]]
  $region45: #{tpu_custom_call.1} parent=0
    _
  %s5 = ssub.s32 1, %s3
  %s6 = scalar_select 0, %s5, %s3
  $region1: #{tpu_custom_call.1} parent=0
    #allocation2 [shape = 'u8[32768]{0}', space=vmem, size = 0x8000, scoped, tag = 'input window, operand 0']
    #allocation3 [shape = 's32[2]{0}', space=sflag, size = 0x8, scoped, tag = 'scoped memory for tpu_custom_call.1']
    #allocation4 [shape = 's32[2]{0}', space=sflag, size = 0x8, scoped, tag = 'scoped memory for tpu_custom_call.1']
    #allocation5 [shape = 'u8[32768]{0}', space=vmem, size = 0x8000, scoped, tag = 'output window, operand 0']
    %7 = vsyncpa [#allocation3], 0
    %s8 = scalar_lea.sflag [#allocation3], 1
    %9 = vsyncpa %s8, 0
    %10 = vsyncpa [#allocation4], 0
    %s11 = scalar_lea.sflag [#allocation4], 1
    %12 = vsyncpa %s11, 0
    loop: start=0, step=1, limit=6
    $region2: #{tpu_custom_call.1} parent=1 // loop_pre_header
      _
    $region3: #{tpu_custom_call.1} parent=1 // loop_header
      %s14 = sphi 0, %s18
      %p15 = scmp.ge.s32.totalorder %s14, 6
      %s21 = sphi 0, %s33
      %s22 = sphi 0, %s29
      %s23 = sphi 0, %s21
      %s24 = sphi 0, %s22
      %s25 = sphi 0, %s23
      %s26 = sphi 0, %s24
      %s38 = sphi 0, %s40
      %s41 = sphi 0, %s38
      %s42 = sphi 0, %s41
      %s58 = sphi 0, %s42
      %s66 = sphi 0, %s68
      %s69 = sphi 0, %s66
      %s70 = sphi 0, %s69
      %s86 = sphi 0, %s70
      %s94 = sphi 0, %s96
      %s97 = sphi 0, %s94
      %s98 = sphi 0, %s97
      %s114 = sphi 0, %s98
    $region4: #{tpu_custom_call.1} parent=1 // loop_header_branch
      %17 = sbr.rel (%p15) target = $region8
    $region5: #{tpu_custom_call.1} parent=1 // loop_body
      %s19 = ssub.s32 %s14, 1
      %s20 = ssub.s32 %s14, 2
      %s27 = sadd.s32 1, %s22
      %p28 = scmp.ge.s32.totalorder %s27, 2
      %s29 = scalar_select %p28, 0, %s27
      %s30 = sadd.s32 1, %s21
      %s31 = scalar_select %p28, %s30, %s21
      %p32 = scmp.ge.s32.totalorder %s31, 2
      %s33 = scalar_select %p32, 0, %s31
      %s34 = ssub.s32 %s21, %s33
      %s35 = ssub.s32 %s22, %s29
      %s36 = sor.u32 %s34, %s35
      %p37 = scmp.eq.s32.totalorder %s36, 0
      %s39 = sadd.s32 %s38, 1
      %s40 = scalar_select %p37, %s38, %s39
      %p43 = pneg %p37
      %p44 = scmp.eq.s32.totalorder %s14, 3
      %p45 = por %p43, %p44
      %p46 = scmp.ne.s32.totalorder %s38, %s41
      %p47 = scmp.eq.s32.totalorder %s14, 0
      %p48 = por %p46, %p47
      %p49 = scmp.ne.s32.totalorder %s38, %s41
      %p50 = scmp.eq.s32.totalorder %s19, 3
      %p51 = por %p49, %p50
      %p52 = scmp.ne.s32.totalorder %s41, %s42
      %p53 = scmp.eq.s32.totalorder %s19, 0
      %p54 = por %p52, %p53
      %p55 = scmp.ne.s32.totalorder %s41, %s42
      %p56 = scmp.eq.s32.totalorder %s20, 3
      %p57 = por %p55, %p56
      %p59 = scmp.ne.s32.totalorder %s42, %s58
      %p60 = scmp.eq.s32.totalorder %s20, 0
      %p61 = por %p59, %p60
      %s62 = ssub.s32 %s21, %s33
      %s63 = ssub.s32 %s22, %s29
      %s64 = sor.u32 %s62, %s63
      %p65 = scmp.eq.s32.totalorder %s64, 0
      %s67 = sadd.s32 %s66, 1
      %s68 = scalar_select %p65, %s66, %s67
      %p71 = pneg %p65
      %p72 = scmp.eq.s32.totalorder %s14, 3
      %p73 = por %p71, %p72
      %p74 = scmp.ne.s32.totalorder %s66, %s69
      %p75 = scmp.eq.s32.totalorder %s14, 0
      %p76 = por %p74, %p75
      %p77 = scmp.ne.s32.totalorder %s66, %s69
      %p78 = scmp.eq.s32.totalorder %s19, 3
      %p79 = por %p77, %p78
      %p80 = scmp.ne.s32.totalorder %s69, %s70
      %p81 = scmp.eq.s32.totalorder %s19, 0
      %p82 = por %p80, %p81
      %p83 = scmp.ne.s32.totalorder %s69, %s70
      %p84 = scmp.eq.s32.totalorder %s20, 3
      %p85 = por %p83, %p84
      %p87 = scmp.ne.s32.totalorder %s70, %s86
      %p88 = scmp.eq.s32.totalorder %s20, 0
      %p89 = por %p87, %p88
      %s90 = ssub.s32 %s21, %s33
      %s91 = ssub.s32 %s22, %s29
      %s92 = sor.u32 %s90, %s91
      %p93 = scmp.eq.s32.totalorder %s92, 0
      %s95 = sadd.s32 %s94, 1
      %s96 = scalar_select %p93, %s94, %s95
      %p99 = pneg %p93
      %p100 = scmp.eq.s32.totalorder %s14, 3
      %p101 = por %p99, %p100
      %p102 = scmp.ne.s32.totalorder %s94, %s97
      %p103 = scmp.eq.s32.totalorder %s14, 0
      %p104 = por %p102, %p103
      %p105 = scmp.ne.s32.totalorder %s94, %s97
      %p106 = scmp.eq.s32.totalorder %s19, 3
      %p107 = por %p105, %p106
      %p108 = scmp.ne.s32.totalorder %s97, %s98
      %p109 = scmp.eq.s32.totalorder %s19, 0
      %p110 = por %p108, %p109
      %p111 = scmp.ne.s32.totalorder %s97, %s98
      %p112 = scmp.eq.s32.totalorder %s20, 3
      %p113 = por %p111, %p112
      %p115 = scmp.ne.s32.totalorder %s98, %s114
      %p116 = scmp.eq.s32.totalorder %s20, 0
      %p117 = por %p115, %p116
      %p118 = scmp.le.s32.totalorder 1, %s14
      %p119 = scmp.lt.s32.totalorder %s14, 5
      %p120 = pnand %p118, %p119
      %p121 = pneg %p120
      // Predicated region
      $region9: #{tpu_custom_call.1} parent=5 // pred_check
        _
      $region10: #{tpu_custom_call.1} parent=5 // pred_check_branch
        %123 = sbr.rel (%p120) target = $region12
      $region11: #{tpu_custom_call.1} parent=5 // pred_region
        %s124 = ssub.s32 %s14, 1
      $region12: #{tpu_custom_call.1} parent=5 // pred_fallthru
        _
      %p125 = scmp.lt.s32.totalorder %s14, 4
      // Predicated region
      $region13: #{tpu_custom_call.1} parent=5 // pred_check
        %p126 = pneg %p125
      $region14: #{tpu_custom_call.1} parent=5 // pred_check_branch
        %128 = sbr.rel (%p126) target = $region16
      $region15: #{tpu_custom_call.1} parent=5 // pred_region
        // Predicated region
        $region17: #{tpu_custom_call.1} parent=15 // pred_check
          %p129 = pneg %p48
        $region18: #{tpu_custom_call.1} parent=15 // pred_check_branch
          %131 = sbr.rel (%p129) target = $region20
        $region19: #{tpu_custom_call.1} parent=15 // pred_region
          %s132 = sand.u32 %s38, 1
          %s133 = scalar_lea.sflag [#allocation3], %s132
          %s134 = sand.u32 %s38, 1
          %s135 = smul.addr %s134, 32
          %s136 = scalar_lea.vmem [#allocation2], %s135
          %s138 = ssub.s32 512, 512
          %139 = vsyncadd %s133, %s138
          %s140 = smul.addr %s21, 8
          %s141 = sadd.s32 %s22, %s140
          %s142 = smul.addr %s141, 128
          %s143 = scalar_lea.hbm %s0, %s142
          %s144 = sshll.u32 %s136, 4
          %s145 = int_to_ptr.vmem [resolvable:$true] %s144
          %150 = dma.hbm_to_vmem [thread:$0]  %s143, 512, %s145, %s133, 256, 128, 8
        $region20: #{tpu_custom_call.1} parent=15 // pred_fallthru
          _
        // Predicated region
        $region21: #{tpu_custom_call.1} parent=15 // pred_check
          %p151 = pneg %p76
        $region22: #{tpu_custom_call.1} parent=15 // pred_check_branch
          %153 = sbr.rel (%p151) target = $region24
        $region23: #{tpu_custom_call.1} parent=15 // pred_region
          %p154 = scmp.lt.s32.totalorder %s21, 1
          %s155 = scalar_select %p154, %s21, 1
          %p156 = scmp.lt.s32.totalorder %s22, 1
          %s157 = scalar_select %p156, %s22, 1
          %s158 = smul.addr %s155, 2
          %s159 = sadd.s32 %s157, %s158
          %s160 = smul.addr %s159, 8
          %s161 = scalar_lea.vmem %s1, %s160
        $region24: #{tpu_custom_call.1} parent=15 // pred_fallthru
          _
      $region16: #{tpu_custom_call.1} parent=5 // pred_fallthru
        _
      %p162 = scmp.le.s32.totalorder 1, %s14
      %p163 = scmp.lt.s32.totalorder %s14, 5
      %p164 = pnand %p162, %p163
      %p165 = pneg %p164
      // Predicated region
      $region25: #{tpu_custom_call.1} parent=5 // pred_check
        _
      $region26: #{tpu_custom_call.1} parent=5 // pred_check_branch
        %167 = sbr.rel (%p164) target = $region28
      $region27: #{tpu_custom_call.1} parent=5 // pred_region
        %s168 = ssub.s32 %s14, 1
        %s169 = sand.u32 %s41, 1
        %s170 = scalar_lea.sflag [#allocation3], %s169
        %s171 = sand.u32 %s41, 1
        %s172 = smul.addr %s171, 32
        %s173 = scalar_lea.vmem [#allocation2], %s172
        // Predicated region
        $region29: #{tpu_custom_call.1} parent=27 // pred_check
          %p174 = pneg %p54
        $region30: #{tpu_custom_call.1} parent=27 // pred_check_branch
          %176 = sbr.rel (%p174) target = $region32
        $region31: #{tpu_custom_call.1} parent=27 // pred_region
          %177 = dma.done %s170, 512
        $region32: #{tpu_custom_call.1} parent=27 // pred_fallthru
          _
        %s178 = sand.u32 %s41, 1
        %s179 = scalar_lea.sflag [#allocation3], %s178
        %s180 = sand.u32 %s41, 1
        %s181 = smul.addr %s180, 32
        %s182 = scalar_lea.vmem [#allocation2], %s181
        %p183 = pneg %p54
        %p184 = pneg %p51
        %p185 = scmp.lt.s32.totalorder %s23, 1
        %s186 = scalar_select %p185, %s23, 1
        %p187 = scmp.lt.s32.totalorder %s24, 1
        %s188 = scalar_select %p187, %s24, 1
        %s189 = smul.addr %s186, 2
        %s190 = sadd.s32 %s188, %s189
        %s191 = smul.addr %s190, 8
        %s192 = scalar_lea.vmem %s1, %s191
        %p193 = pneg %p82
        %p194 = pneg %p79
        %p195 = pneg %p110
        %p196 = pneg %p107
        %s197 = sand.u32 %s97, 1
        %s198 = scalar_lea.sflag [#allocation4], %s197
        %s199 = sand.u32 %s97, 1
        %s200 = smul.addr %s199, 32
        %s201 = scalar_lea.vmem [#allocation5], %s200
        %p202 = scmp.lt.s32.totalorder %s23, 1
        %s203 = scalar_select %p202, %s23, 1
        %p204 = scmp.lt.s32.totalorder %s24, 1
        %s205 = scalar_select %p204, %s24, 1
        %s206 = smul.addr %s203, 2
        %s207 = sadd.s32 %s205, %s206
        %s208 = smul.addr %s207, 8
        %s209 = scalar_lea.vmem %s1, %s208
        %v210 = vld [vmem:[%s209] sm:$0xff]
        %v211 = vmul.f32 %v210, 0.0031415927
        %v212 = vand.u32 2147483647, %v211
        %vm213 = vcmp.le.f32.partialorder %v212, 0.7853982
        %vm214 = vcmp.lt.s32.totalorder %v211, 0
        %v215 = vand.u32 %v211, 2139095040
        %v216 = vshrl.u32 %v215, 23
        %v217 = vsub.s32 %v216, 127
        %v218 = vand.u32 2147483647, %v211
        %v219 = vand.u32 %v218, 8388607
        %v220 = vor.u32 %v219, 8388608
        %v221 = vsub.s32 0, %v220
        %v222 = vadd.s32 %v217, 1
        %vm223 = vcmp.gt.s32.totalorder %v222, 0
        %v224 = vsel %vm223, %v222, 0
        %v225 = vshrl.u32 %v224, 5
        %v226 = vand.u32 %v224, 31
        %v227 = vsub.s32 32, %v226
        %v228 = vshrl.u32 683565275, %v227
        %v229 = vshll.u32 683565275, %v226
        %v230 = vshrl.u32 2475754826, %v227
        %v231 = vor.u32 %v229, %v230
        %v232 = vshll.u32 2475754826, %v226
        %v233 = vshrl.u32 2131351028, %v227
        %v234 = vor.u32 %v232, %v233
        %v235 = vshll.u32 2131351028, %v226
        %v236 = vshrl.u32 2102212464, %v227
        %v237 = vor.u32 %v235, %v236
        %v238 = vshll.u32 2102212464, %v226
        %v239 = vshrl.u32 920167782, %v227
        %v240 = vor.u32 %v238, %v239
        %v241 = vshll.u32 920167782, %v226
        %v242 = vshrl.u32 1326507024, %v227
        %v243 = vor.u32 %v241, %v242
        %vm244 = vcmp.lt.s32.totalorder %v225, 1
        %vm245 = vcmp.lt.s32.totalorder %v225, 2
        %vm246 = vcmp.lt.s32.totalorder %v225, 3
        %vm247 = vcmp.lt.s32.totalorder %v225, 4
        %v248 = vsel %vm244, %v228, %v231
        %v249 = vsel %vm247, %v237, 2102212464
        %v250 = vsel %vm246, %v234, %v249
        %v251 = vsel %vm245, %v248, %v250
        %v252 = vsel %vm244, %v231, %v234
        %v253 = vsel %vm247, %v240, 920167782
        %v254 = vsel %vm246, %v237, %v253
        %v255 = vsel %vm245, %v252, %v254
        %v256 = vsel %vm244, %v234, %v237
        %v257 = vsel %vm247, %v243, 1326507024
        %v258 = vsel %vm246, %v240, %v257
        %v259 = vsel %vm245, %v256, %v258
        %v260 = vshll.u32 %v220, 8
        %v261 = vmul.u32.u64.compose %v260, %v259
        %v262 = vextract.low.u32 %v261
        %v263 = vextract.high.u32 %v261
        %v264 = vmul.u32.u64.compose %v260, %v255
        %v265 = vextract.low.u32 %v264
        %v266 = vextract.high.u32 %v264
        %v267 = vmul.u32 %v260, %v251
        %v268 = vadd.s32 %v263, %v265
        %vm269 = vc.u32 %v263, %v265
        %v270 = vadd.s32 %v266, 1
        %v271 = vsel %vm269, %v270, %v266
        %v272 = vadd.s32 %v267, %v271
        %v273 = vadd.s32 %v272, 536870912
        %v274 = vshrl.u32 %v273, 30
        %v275 = vshll.u32 %v274, 30
        %v276 = vsub.s32 %v272, %v275
        %vm277 = vcmp.lt.s32.totalorder %v276, 0
        %v278 = vsub.s32 0, %v276
        %v279 = vsel %vm277, %v278, %v276
        %v280 = vclz %v279
        %v281 = vsub.s32 %v280, 2
        %vm282 = vcmp.gt.s32.totalorder 0, %v281
        %v283 = vsel %vm282, 0, %v281
        %v284 = vsub.s32 32, %v283
        %v285 = vshll.u32 %v276, %v283
        %v286 = vshrl.u32 %v268, %v284
        %v287 = vor.u32 %v285, %v286
        %v288 = vsub.s32 4294967266, %v283
        %v289 = vadd.s32 %v288, 127
        %v290 = vshll.u32 %v289, 23
        %v291 = vor.u32 4788187, %v290
        %v292 = vand.u32 2147483647, %v291
        %v294 = vcvt.s32.f32 %v287
        %v295 = vmul.f32 %v294, %v292
        %v296 = vxor.u32 %v295, 2147483648
        %v297 = vsel %vm214, %v296, %v295
        %v298 = vsub.s32 4, %v274
        %v299 = vsel %vm214, %v298, %v274
        %v300 = vsel %vm213, %v211, %v297
        %v301 = vsel %vm213, 0, %v299
        %v302 = vcosq.f32.pop %v300
        %v303 = vsinq.f32.pop %v300
        %vm304 = vweird.f32 %v211
        %v305 = vadd.s32 %v301, 3
        %v306 = vand.u32 %v305, 3
        %vm307 = vcmp.lt.s32.totalorder %v306, 2
        %vm308 = vcmp.eq.s32.totalorder %v306, 0
        %v309 = vxor.u32 %v303, 2147483648
        %v310 = vsel %vm308, %v302, %v309
        %vm311 = vcmp.eq.s32.totalorder %v306, 2
        %v312 = vxor.u32 %v302, 2147483648
        %v313 = vsel %vm311, %v312, %v303
        %v314 = vsel %vm307, %v310, %v313
        %v315 = vsel %vm304, nan, %v314
        %v316 = vand.u32 2147483647, %v211
        %vm317 = vcmp.le.f32.partialorder %v316, 0.7853982
        %vm318 = vcmp.lt.s32.totalorder %v211, 0
        %v319 = vand.u32 %v211, 2139095040
        %v320 = vshrl.u32 %v319, 23
        %v321 = vsub.s32 %v320, 127
        %v322 = vand.u32 2147483647, %v211
        %v323 = vand.u32 %v322, 8388607
        %v324 = vor.u32 %v323, 8388608
        %v325 = vsub.s32 0, %v324
        %v326 = vadd.s32 %v321, 1
        %vm327 = vcmp.gt.s32.totalorder %v326, 0
        %v328 = vsel %vm327, %v326, 0
        %v329 = vshrl.u32 %v328, 5
        %v330 = vand.u32 %v328, 31
        %v331 = vsub.s32 32, %v330
        %v332 = vshrl.u32 683565275, %v331
        %v333 = vshll.u32 683565275, %v330
        %v334 = vshrl.u32 2475754826, %v331
        %v335 = vor.u32 %v333, %v334
        %v336 = vshll.u32 2475754826, %v330
        %v337 = vshrl.u32 2131351028, %v331
        %v338 = vor.u32 %v336, %v337
        %v339 = vshll.u32 2131351028, %v330
        %v340 = vshrl.u32 2102212464, %v331
        %v341 = vor.u32 %v339, %v340
        %v342 = vshll.u32 2102212464, %v330
        %v343 = vshrl.u32 920167782, %v331
        %v344 = vor.u32 %v342, %v343
        %v345 = vshll.u32 920167782, %v330
        %v346 = vshrl.u32 1326507024, %v331
        %v347 = vor.u32 %v345, %v346
        %vm348 = vcmp.lt.s32.totalorder %v329, 1
        %vm349 = vcmp.lt.s32.totalorder %v329, 2
        %vm350 = vcmp.lt.s32.totalorder %v329, 3
        %vm351 = vcmp.lt.s32.totalorder %v329, 4
        %v352 = vsel %vm348, %v332, %v335
        %v353 = vsel %vm351, %v341, 2102212464
        %v354 = vsel %vm350, %v338, %v353
        %v355 = vsel %vm349, %v352, %v354
        %v356 = vsel %vm348, %v335, %v338
        %v357 = vsel %vm351, %v344, 920167782
        %v358 = vsel %vm350, %v341, %v357
        %v359 = vsel %vm349, %v356, %v358
        %v360 = vsel %vm348, %v338, %v341
        %v361 = vsel %vm351, %v347, 1326507024
        %v362 = vsel %vm350, %v344, %v361
        %v363 = vsel %vm349, %v360, %v362
        %v364 = vshll.u32 %v324, 8
        %v365 = vmul.u32.u64.compose %v364, %v363
        %v366 = vextract.low.u32 %v365
        %v367 = vextract.high.u32 %v365
        %v368 = vmul.u32.u64.compose %v364, %v359
        %v369 = vextract.low.u32 %v368
        %v370 = vextract.high.u32 %v368
        %v371 = vmul.u32 %v364, %v355
        %v372 = vadd.s32 %v367, %v369
        %vm373 = vc.u32 %v367, %v369
        %v374 = vadd.s32 %v370, 1
        %v375 = vsel %vm373, %v374, %v370
        %v376 = vadd.s32 %v371, %v375
        %v377 = vadd.s32 %v376, 536870912
        %v378 = vshrl.u32 %v377, 30
        %v379 = vshll.u32 %v378, 30
        %v380 = vsub.s32 %v376, %v379
        %vm381 = vcmp.lt.s32.totalorder %v380, 0
        %v382 = vsub.s32 0, %v380
        %v383 = vsel %vm381, %v382, %v380
        %v384 = vclz %v383
        %v385 = vsub.s32 %v384, 2
        %vm386 = vcmp.gt.s32.totalorder 0, %v385
        %v387 = vsel %vm386, 0, %v385
        %v388 = vsub.s32 32, %v387
        %v389 = vshll.u32 %v380, %v387
        %v390 = vshrl.u32 %v372, %v388
        %v391 = vor.u32 %v389, %v390
        %v392 = vsub.s32 4294967266, %v387
        %v393 = vadd.s32 %v392, 127
        %v394 = vshll.u32 %v393, 23
        %v395 = vor.u32 4788187, %v394
        %v396 = vand.u32 2147483647, %v395
        %v398 = vcvt.s32.f32 %v391
        %v399 = vmul.f32 %v398, %v396
        %v400 = vxor.u32 %v399, 2147483648
        %v401 = vsel %vm318, %v400, %v399
        %v402 = vsub.s32 4, %v378
        %v403 = vsel %vm318, %v402, %v378
        %v404 = vsel %vm317, %v211, %v401
        %v405 = vsel %vm317, 0, %v403
        %v406 = vcosq.f32.pop %v404
        %v407 = vsinq.f32.pop %v404
        %vm408 = vweird.f32 %v211
        %v409 = vand.u32 %v405, 3
        %vm410 = vcmp.lt.s32.totalorder %v409, 2
        %vm411 = vcmp.eq.s32.totalorder %v409, 0
        %v412 = vxor.u32 %v407, 2147483648
        %v413 = vsel %vm411, %v406, %v412
        %vm414 = vcmp.eq.s32.totalorder %v409, 2
        %v415 = vxor.u32 %v406, 2147483648
        %v416 = vsel %vm414, %v415, %v407
        %v417 = vsel %vm410, %v413, %v416
        %v418 = vsel %vm408, nan, %v417
        %v419 = vld [vmem:[%s173] sm:$0xff]
        %v420 = vadd.f32 %v419, 0.0
        %421 = vst [vmem:[%s201] sm:$0xff] %v420
        %s422 = scalar_lea.vmem %s173, 16 [#allocation2]
        %v423 = vld [vmem:[%s422] sm:$0xff]
        %v424 = vadd.f32 %v423, 1.0
        %s425 = scalar_lea.vmem %s201, 16 [#allocation5]
        %426 = vst [vmem:[%s425] sm:$0xff] %v424
        %v427 = vmul.f32 %v418, 0.0
        %v428 = vadd.f32 %v427, %v315
        %v429 = vmul.f32 %v315, 0.0
        %v430 = vsub.f32 %v418, %v429
        %s431 = scalar_lea.vmem %s173, 8 [#allocation2]
        %v432 = vld [vmem:[%s431] sm:$0xff]
        %v433 = vadd.f32 %v432, %v428
        %s434 = scalar_lea.vmem %s201, 8 [#allocation5]
        %435 = vst [vmem:[%s434] sm:$0xff] %v433
        %s436 = scalar_lea.vmem %s173, 24 [#allocation2]
        %v437 = vld [vmem:[%s436] sm:$0xff]
        %v438 = vadd.f32 %v437, %v430
        %s439 = scalar_lea.vmem %s201, 24 [#allocation5]
        %440 = vst [vmem:[%s439] sm:$0xff] %v438
        %s441 = sand.u32 %s97, 1
        %s442 = scalar_lea.sflag [#allocation4], %s441
        %s443 = sand.u32 %s97, 1
        %s444 = smul.addr %s443, 32
        %s445 = scalar_lea.vmem [#allocation5], %s444
        // Predicated region
        $region33: #{tpu_custom_call.1} parent=27 // pred_check
          %p446 = pneg %p107
        $region34: #{tpu_custom_call.1} parent=27 // pred_check_branch
          %448 = sbr.rel (%p446) target = $region36
        $region35: #{tpu_custom_call.1} parent=27 // pred_region
          %s450 = ssub.s32 512, 512
          %451 = vsyncadd %s442, %s450
          %s452 = smul.addr %s23, 8
          %s453 = sadd.s32 %s24, %s452
          %s454 = smul.addr %s453, 128
          %s455 = scalar_lea.hbm %s2, %s454
          %s456 = sshll.u32 %s445, 4
          %s457 = int_to_ptr.vmem [resolvable:$true] %s456
          %462 = dma.vmem_to_hbm [thread:$0]  %s457, 512, %s455, %s442, 128, 256, 8
        $region36: #{tpu_custom_call.1} parent=27 // pred_fallthru
          _
      $region28: #{tpu_custom_call.1} parent=5 // pred_fallthru
        _
      %p463 = scmp.le.s32.totalorder 2, %s14
      // Predicated region
      $region37: #{tpu_custom_call.1} parent=5 // pred_check
        %p464 = pneg %p463
      $region38: #{tpu_custom_call.1} parent=5 // pred_check_branch
        %466 = sbr.rel (%p464) target = $region40
      $region39: #{tpu_custom_call.1} parent=5 // pred_region
        %s467 = ssub.s32 %s14, 2
        // Predicated region
        $region41: #{tpu_custom_call.1} parent=39 // pred_check
          %p468 = pneg %p113
        $region42: #{tpu_custom_call.1} parent=39 // pred_check_branch
          %470 = sbr.rel (%p468) target = $region44
        $region43: #{tpu_custom_call.1} parent=39 // pred_region
          %s471 = sand.u32 %s98, 1
          %s472 = scalar_lea.sflag [#allocation4], %s471
          %s473 = sand.u32 %s98, 1
          %s474 = smul.addr %s473, 32
          %s475 = scalar_lea.vmem [#allocation5], %s474
          %476 = dma.done %s472, 512
        $region44: #{tpu_custom_call.1} parent=39 // pred_fallthru
          _
      $region40: #{tpu_custom_call.1} parent=5 // pred_fallthru
        _
    $region6: #{tpu_custom_call.1} parent=1 // loop_footer
      %s18 = sadd.s32 1, %s14
    $region7: #{tpu_custom_call.1} parent=1 // loop_footer_branch
      %13 = sbr.rel target = $region3
    $region8: #{tpu_custom_call.1} parent=1 // loop_exit
      _
    %477 = vsyncpa [#allocation3], 1
    %s478 = scalar_lea.sflag [#allocation3], 1
    %479 = vsyncpa %s478, 1
    %480 = vsyncpa [#allocation4], 1
    %s481 = scalar_lea.sflag [#allocation4], 1
    %482 = vsyncpa %s481, 1

</llo_original>
